<compile_context>
chip_gen: v7x
topology: tpu7x:2x2x1
jax: 0.10.0
libtpu: 0.0.40
codegen_flags: <defaults>
</compile_context>

<pallas_src>
import math

import jax
import jax.numpy as jnp
from jax import lax
from jax.experimental import pallas as pl
from jax.experimental.pallas import tpu as pltpu


def _round_up(x, m):
    return ((x + m - 1) // m) * m


def _linear_kernel(x_ref, w_ref, b_ref, o_ref, acc_ref):
    # x_ref: (tm, tk) bf16, w_ref: (tn, tk) bf16, b_ref: (1, tn) f32,
    # o_ref: (tm, tn), acc_ref: (tm, tn) f32 scratch (resident across K).
    k = pl.program_id(2)

    @pl.when(k == 0)
    def _init():
        acc_ref[...] = jnp.zeros_like(acc_ref)

    # Contract on K (dim 1 of both operands) -> (tm, tn); MXU handles the
    # transposed contraction natively, no weight transpose needed.
    acc_ref[...] += lax.dot_general(
        x_ref[...],
        w_ref[...],
        dimension_numbers=(((1,), (1,)), ((), ())),
        preferred_element_type=jnp.float32,
    )

    @pl.when(k == pl.num_programs(2) - 1)
    def _finalize():
        o_ref[...] = (acc_ref[...] + b_ref[...]).astype(o_ref.dtype)


def dynamic_linear(x, weight, bias, *, tm=256, tn=256, tk=512):
    """y = x @ weight.T + bias, matching torch.nn.functional.linear.

    x: (..., in_features), weight: (out_features, in_features),
    bias: (out_features,) or None.
    """
    in_features = x.shape[-1]
    out_features = weight.shape[0]
    lead = x.shape[:-1]
    m = math.prod(lead) if lead else 1
    out_dtype = x.dtype

    # ---- pad to MXU / vreg friendly shapes and pick tile sizes ----
    m_pad = _round_up(max(m, 8), 8)
    if m_pad <= tm:
        tm = m_pad
    else:
        m_pad = _round_up(m_pad, tm)

    n_pad = _round_up(out_features, 128)
    if n_pad <= tn:
        tn = n_pad
    else:
        n_pad = _round_up(n_pad, tn)

    k_pad = _round_up(in_features, 128)
    if k_pad <= tk:
        tk = k_pad
    else:
        k_pad = _round_up(k_pad, tk)

    # ---- prepare operands (bf16 inputs, f32 bias) ----
    x2d = x.reshape(m, in_features)
    if x2d.dtype != jnp.bfloat16:
        x2d = x2d.astype(jnp.bfloat16)
    x2d = jnp.pad(x2d, ((0, m_pad - m), (0, k_pad - in_features)))

    w = weight if weight.dtype == jnp.bfloat16 else weight.astype(jnp.bfloat16)
    w = jnp.pad(w, ((0, n_pad - out_features), (0, k_pad - in_features)))

    if bias is None:
        b2d = jnp.zeros((1, n_pad), jnp.float32)
    else:
        b2d = jnp.pad(
            bias.astype(jnp.float32).reshape(1, out_features),
            ((0, 0), (0, n_pad - out_features)),
        )

    grid = (m_pad // tm, n_pad // tn, k_pad // tk)

    out_itemsize = jnp.dtype(out_dtype).itemsize
    cost = pl.CostEstimate(
        flops=2 * m_pad * n_pad * k_pad,
        transcendentals=0,
        bytes_accessed=(
            m_pad * k_pad * 2 + n_pad * k_pad * 2 + n_pad * 4
            + m_pad * n_pad * out_itemsize
        ),
    )

    # double-buffered bf16 input tiles + f32 bias tile + resident f32 acc
    # + double-buffered out tile, plus headroom; clamp to v7x-safe 64 MiB.
    needed = (
        2 * (tm * tk * 2 + tn * tk * 2 + tn * 4)
        + tm * tn * 4
        + 2 * tm * tn * out_itemsize
        + (1 << 20)
    )
    vmem_limit = min(64 << 20, max(needed, 32 << 20))

    out = pl.pallas_call(
        _linear_kernel,
        out_shape=jax.ShapeDtypeStruct((m_pad, n_pad), out_dtype),
        grid_spec=pltpu.PrefetchScalarGridSpec(
            num_scalar_prefetch=0,
            grid=grid,
            in_specs=[
                pl.BlockSpec((tm, tk), lambda i, j, k: (i, k)),   # x (M, K)
                pl.BlockSpec((tn, tk), lambda i, j, k: (j, k)),   # W (N, K)
                pl.BlockSpec((1, tn), lambda i, j, k: (0, j)),    # bias (1, N)
            ],
            out_specs=pl.BlockSpec((tm, tn), lambda i, j, k: (i, j)),
            scratch_shapes=[pltpu.VMEM((tm, tn), jnp.float32)],
        ),
        compiler_params=pltpu.CompilerParams(
            dimension_semantics=("parallel", "parallel", "arbitrary"),
            vmem_limit_bytes=vmem_limit,
        ),
        cost_estimate=cost,
    )(x2d, w, b2d)

    return out[:m, :out_features].reshape(*lead, out_features)


class DynamicLinearPallas:
    """Mirrors the lazy-init behavior of the PyTorch DynamicLinear."""

    # TODO(synk): Python-side lazy param init is not jit/pmap-traceable state,
    # matching the original module's eager semantics only.

    def __init__(self, out_features=None, bias=True, same_dim=False, seed=0):
        if not same_dim and out_features is None:
            raise ValueError("out_features must be specified if same_dim=False")
        self.out_features = out_features
        self.same_dim = same_dim
        self.use_bias = bias
        self.weight = None          # f32 master copy (torch-like param)
        self.bias_term = None
        self._weight_bf16 = None    # cached bf16 copy fed to the MXU
        self._key = jax.random.PRNGKey(seed)

    def __call__(self, x):
        if self.weight is None:
            in_features = x.shape[-1]
            if self.same_dim:
                self.out_features = in_features
            kw, kb = jax.random.split(self._key)
            # kaiming_uniform_(a=sqrt(5)) -> bound = 1/sqrt(fan_in)
            bound = 1.0 / float(in_features) ** 0.5
            self.weight = jax.random.uniform(
                kw, (self.out_features, in_features), jnp.float32,
                minval=-bound, maxval=bound)
            self._weight_bf16 = self.weight.astype(jnp.bfloat16)
            if self.use_bias:
                self.bias_term = jax.random.uniform(
                    kb, (self.out_features,), jnp.float32,
                    minval=-bound, maxval=bound)
        return dynamic_linear(x, self._weight_bf16, self.bias_term)


if __name__ == "__main__":
    key = jax.random.PRNGKey(0)
    # x: (batch=2, seq=8, hidden=32)
    x = jax.random.normal(key, (2, 8, 32), dtype=jnp.float32)

    layer = DynamicLinearPallas(out_features=64, bias=True, same_dim=False, seed=0)
    y = layer(x)
    y = jax.block_until_ready(y)

    # Reference in plain JAX using the same bf16-quantized operands the MXU sees.
    x_q = x.astype(jnp.bfloat16).astype(jnp.float32)
    w_q = layer.weight.astype(jnp.bfloat16).astype(jnp.float32)
    y_ref = x_q @ w_q.T + layer.bias_term

    assert y.shape == (2, 8, 64), y.shape
    assert jnp.allclose(y, y_ref, atol=1e-3, rtol=1e-3), "mismatch vs reference"

    print("KERNEL_OK")
</pallas_src>

<mosaic_0001>
module attributes {stable_mosaic.version = 11 : i64} {
  func.func @_linear_kernel(%arg0: i32, %arg1: i32, %arg2: i32, %arg3: memref<16x128xbf16, #tpu.memory_space<vmem>>, %arg4: memref<128x128xbf16, #tpu.memory_space<vmem>>, %arg5: memref<1x128xf32, #tpu.memory_space<vmem>>, %arg6: memref<16x128xf32, #tpu.memory_space<vmem>>, %arg7: memref<16x128xf32, #tpu.memory_space<vmem>>) attributes {dimension_semantics = [#tpu.dimension_semantics<parallel>, #tpu.dimension_semantics<parallel>, #tpu.dimension_semantics<arbitrary>], iteration_bounds = array<i64: 1, 1, 1>, scalar_prefetch = 0 : i64, scratch_operands = 1 : i64, tpu.core_type = #tpu.core_type<tc>, window_params = [{transform_indices = @transform_0, window_bounds = array<i64: 16, 128>}, {transform_indices = @transform_1, window_bounds = array<i64: 128, 128>}, {transform_indices = @transform_2, window_bounds = array<i64: 1, 128>}, {transform_indices = @transform_3, window_bounds = array<i64: 16, 128>}]} {
    %c0_i32 = arith.constant 0 : i32
    %0 = arith.cmpi eq, %arg2, %c0_i32 : i32
    %1 = arith.extui %0 : i1 to i32
    %c0_i32_0 = arith.constant 0 : i32
    %2 = arith.cmpi ne, %1, %c0_i32_0 : i32
    scf.if %2 {
      %cst_10 = arith.constant 0.000000e+00 : f32
      %12 = vector.broadcast %cst_10 : f32 to vector<16x128xf32>
      %c0_11 = arith.constant 0 : index
      %c0_12 = arith.constant 0 : index
      %13 = vector.load %arg7[%c0_11, %c0_12] : memref<16x128xf32, #tpu.memory_space<vmem>>, vector<16x128xf32>
      tpu.vector_store %arg7[%c0_11, %c0_12], %12 {strides = array<i32>} : memref<16x128xf32, #tpu.memory_space<vmem>>, vector<16x128xf32>,
    } else {
    }
    %c0 = arith.constant 0 : index
    %c0_1 = arith.constant 0 : index
    %3 = vector.load %arg7[%c0, %c0_1] : memref<16x128xf32, #tpu.memory_space<vmem>>, vector<16x128xf32>
    %c0_2 = arith.constant 0 : index
    %c0_3 = arith.constant 0 : index
    %4 = vector.load %arg3[%c0_2, %c0_3] : memref<16x128xbf16, #tpu.memory_space<vmem>>, vector<16x128xbf16>
    %c0_4 = arith.constant 0 : index
    %c0_5 = arith.constant 0 : index
    %5 = vector.load %arg4[%c0_4, %c0_5] : memref<128x128xbf16, #tpu.memory_space<vmem>>, vector<128x128xbf16>
    %cst = arith.constant dense<0.000000e+00> : vector<16x128xf32>
    %6 = tpu.matmul %4, %5, %cst {dimension_numbers = #tpu.dot_dimension_numbers<[1], [1], [0], [0], [0, 0, 1, 0], [], []>} : vector<16x128xbf16>, vector<128x128xbf16>, vector<16x128xf32> -> vector<16x128xf32>
    %7 = arith.addf %3, %6 : vector<16x128xf32>
    %c0_6 = arith.constant 0 : index
    %c0_7 = arith.constant 0 : index
    %8 = vector.load %arg7[%c0_6, %c0_7] : memref<16x128xf32, #tpu.memory_space<vmem>>, vector<16x128xf32>
    tpu.vector_store %arg7[%c0_6, %c0_7], %7 {strides = array<i32>} : memref<16x128xf32, #tpu.memory_space<vmem>>, vector<16x128xf32>,
    %c0_i32_8 = arith.constant 0 : i32
    %9 = arith.cmpi eq, %arg2, %c0_i32_8 : i32
    %10 = arith.extui %9 : i1 to i32
    %c0_i32_9 = arith.constant 0 : i32
    %11 = arith.cmpi ne, %10, %c0_i32_9 : i32
    scf.if %11 {
      %c0_10 = arith.constant 0 : index
      %c0_11 = arith.constant 0 : index
      %12 = vector.load %arg7[%c0_10, %c0_11] : memref<16x128xf32, #tpu.memory_space<vmem>>, vector<16x128xf32>
      %c0_12 = arith.constant 0 : index
      %c0_13 = arith.constant 0 : index
      %13 = vector.load %arg5[%c0_12, %c0_13] : memref<1x128xf32, #tpu.memory_space<vmem>>, vector<1x128xf32>
      %14 = vector.broadcast %13 : vector<1x128xf32> to vector<16x128xf32>
      %15 = arith.addf %12, %14 : vector<16x128xf32>
      %c0_14 = arith.constant 0 : index
      %c0_15 = arith.constant 0 : index
      %16 = vector.load %arg6[%c0_14, %c0_15] : memref<16x128xf32, #tpu.memory_space<vmem>>, vector<16x128xf32>
      tpu.vector_store %arg6[%c0_14, %c0_15], %15 {strides = array<i32>} : memref<16x128xf32, #tpu.memory_space<vmem>>, vector<16x128xf32>,
    } else {
    }
    return
  }
  func.func @transform_0(%arg0: i32, %arg1: i32, %arg2: i32) -> (i32, i32) {
    %c0_i32 = arith.constant 0 : i32
    return %arg0, %arg2 : i32, i32
  }
  func.func @transform_1(%arg0: i32, %arg1: i32, %arg2: i32) -> (i32, i32) {
    %c0_i32 = arith.constant 0 : i32
    return %arg1, %arg2 : i32, i32
  }
  func.func @transform_2(%arg0: i32, %arg1: i32, %arg2: i32) -> (i32, i32) {
    %c0_i32 = arith.constant 0 : i32
    %c0_i32_0 = arith.constant 0 : i32
    return %c0_i32, %arg1 : i32, i32
  }
  func.func @transform_3(%arg0: i32, %arg1: i32, %arg2: i32) -> (i32, i32) {
    %c0_i32 = arith.constant 0 : i32
    return %arg0, %arg1 : i32, i32
  }
}

</mosaic_0001>

<llo_original>
// kernel: tpu_custom_call.1
$region0: #{tpu_custom_call.1}
  #allocation0 [shape = 'u32[]', space=smem, size = 0x4, offset = 0x4, fixed_abs, tag = 'smem constant byte address 0x4 - core index']
  #allocation1 [shape = 'u32[144,128]{1,0:T(1,128)}', space=vmem, size = 0x12000, scoped, tag = 'internal scratch']
  #allocation2 [shape = 'f32[16,128]{1,0:T(8,128)}', space=vmem, size = 0x2000, scoped, tag = 'scratch operand']
  %s0 = inlined_call_operand.hbm [shape: bf16[16,128], index: 0, kind: input, shape index: {}]
  %s1 = inlined_call_operand.hbm [shape: bf16[128,128], index: 1, kind: input, shape index: {}]
  %s2 = inlined_call_operand.vmem [shape: f32[1,128], index: 2, kind: input, shape index: {}]
  %s3 = inlined_call_operand.hbm [shape: f32[16,128], index: 3, kind: output, shape index: {}]
  %s4 = sld [smem:[#allocation0]]
  $region38: #{tpu_custom_call.1} parent=0
    _
  %s6 = ssub.s32 1, %s4
  %s7 = scalar_select 0, %s6, %s4
  $region1: #{tpu_custom_call.1} parent=0
    #allocation3 [shape = 'u8[4096]{0}', space=vmem, size = 0x1000, scoped, tag = 'input window, operand 0, single buffered']
    #allocation4 [shape = 's32[1]{0}', space=sflag, size = 0x4, scoped, tag = 'scoped memory for tpu_custom_call.1']
    #allocation5 [shape = 's32[1]{0}', space=sflag, size = 0x4, scoped, tag = 'scoped memory for tpu_custom_call.1']
    #allocation6 [shape = 'u8[32768]{0}', space=vmem, size = 0x8000, scoped, tag = 'input window, operand 1, single buffered']
    #allocation7 [shape = 's32[1]{0}', space=sflag, size = 0x4, scoped, tag = 'scoped memory for tpu_custom_call.1']
    #allocation8 [shape = 'u8[8192]{0}', space=vmem, size = 0x2000, scoped, tag = 'output window, operand 0, single buffered']
    %8 = vsyncpa [#allocation4], 0
    %9 = vsyncpa [#allocation7], 0
    %10 = vsyncpa [#allocation5], 0
    // Predicated region
    $region2: #{tpu_custom_call.1} parent=1 // pred_check
      _
    $region3: #{tpu_custom_call.1} parent=1 // pred_check_branch
      %12 = sbr.rel (0) target = $region5
    $region4: #{tpu_custom_call.1} parent=1 // pred_region
      %s14 = ssub.s32 128, 128
      %15 = vsyncadd [#allocation4], %s14
      %s16 = sshll.u32 [#allocation3], 4
      %s17 = int_to_ptr.vmem [resolvable:$true] %s16
      %22 = dma.hbm_to_vmem [thread:$0]  %s0, 128, %s17, [#allocation4], 64, 64, 4
    $region5: #{tpu_custom_call.1} parent=1 // pred_fallthru
      _
    // Predicated region
    $region6: #{tpu_custom_call.1} parent=1 // pred_check
      _
    $region7: #{tpu_custom_call.1} parent=1 // pred_check_branch
      %24 = sbr.rel (0) target = $region9
    $region8: #{tpu_custom_call.1} parent=1 // pred_region
      %s26 = ssub.s32 1024, 1024
      %27 = vsyncadd [#allocation7], %s26
      %s28 = sshll.u32 [#allocation6], 4
      %s29 = int_to_ptr.vmem [resolvable:$true] %s28
      %34 = dma.hbm_to_vmem [thread:$0]  %s1, 1024, %s29, [#allocation7], 64, 64, 4
    $region9: #{tpu_custom_call.1} parent=1 // pred_fallthru
      _
    // Predicated region
    $region10: #{tpu_custom_call.1} parent=1 // pred_check
      _
    $region11: #{tpu_custom_call.1} parent=1 // pred_check_branch
      %36 = sbr.rel (0) target = $region13
    $region12: #{tpu_custom_call.1} parent=1 // pred_region
      _
    $region13: #{tpu_custom_call.1} parent=1 // pred_fallthru
      _
    // Predicated region
    $region14: #{tpu_custom_call.1} parent=1 // pred_check
      _
    $region15: #{tpu_custom_call.1} parent=1 // pred_check_branch
      %38 = sbr.rel (0) target = $region17
    $region16: #{tpu_custom_call.1} parent=1 // pred_region
      %39 = dma.done [#allocation4], 128
    $region17: #{tpu_custom_call.1} parent=1 // pred_fallthru
      _
    // Predicated region
    $region18: #{tpu_custom_call.1} parent=1 // pred_check
      _
    $region19: #{tpu_custom_call.1} parent=1 // pred_check_branch
      %41 = sbr.rel (0) target = $region21
    $region20: #{tpu_custom_call.1} parent=1 // pred_region
      %42 = dma.done [#allocation7], 1024
    $region21: #{tpu_custom_call.1} parent=1 // pred_fallthru
      _
    %p44 = scmp.eq.s32.totalorder 0, 0
    // Predicated region
    $region22: #{tpu_custom_call.1} parent=1 // pred_check
      %p45 = pneg %p44
    $region23: #{tpu_custom_call.1} parent=1 // pred_check_branch
      %47 = sbr.rel (%p45) target = $region25
    $region24: #{tpu_custom_call.1} parent=1 // pred_region
      %48 = vst [vmem:[#allocation2] sm:$0xff] 0.0
      %49 = vst [vmem:[#allocation2 + $0x8] sm:$0xff] 0.0
    $region25: #{tpu_custom_call.1} parent=1 // pred_fallthru
      _
    %v50 = vld [vmem:[#allocation2] sm:$0xff]
    %v51 = vld [vmem:[#allocation2 + $0x8] sm:$0xff]
    %v52 = vld [vmem:[#allocation3] sm:$0xf]
    %v53 = vld [vmem:[#allocation3 + $0x4] sm:$0xf]
    %v54 = vld [vmem:[#allocation6] sm:$0xf]
    %v55 = vld [vmem:[#allocation6 + $0x4] sm:$0xf]
    %v56 = vld [vmem:[#allocation6 + $0x8] sm:$0xf]
    %v57 = vld [vmem:[#allocation6 + $0xc] sm:$0xf]
    %v58 = vld [vmem:[#allocation6 + $0x10] sm:$0xf]
    %v59 = vld [vmem:[#allocation6 + $0x14] sm:$0xf]
    %v60 = vld [vmem:[#allocation6 + $0x18] sm:$0xf]
    %v61 = vld [vmem:[#allocation6 + $0x1c] sm:$0xf]
    %v62 = vld [vmem:[#allocation6 + $0x20] sm:$0xf]
    %v63 = vld [vmem:[#allocation6 + $0x24] sm:$0xf]
    %v64 = vld [vmem:[#allocation6 + $0x28] sm:$0xf]
    %v65 = vld [vmem:[#allocation6 + $0x2c] sm:$0xf]
    %v66 = vld [vmem:[#allocation6 + $0x30] sm:$0xf]
    %v67 = vld [vmem:[#allocation6 + $0x34] sm:$0xf]
    %v68 = vld [vmem:[#allocation6 + $0x38] sm:$0xf]
    %v69 = vld [vmem:[#allocation6 + $0x3c] sm:$0xf]
    %v72 = vunpack.c.l.b16 %v52
    %v73 = vunpack.c.l.b16 %v53
    %v74 = vpack.c.b16 %v73, %v72
    %v92 = vunpack.c.l.b16 %v54
    %v93 = vunpack.c.l.b16 %v55
    %v94 = vunpack.c.l.b16 %v56
    %v95 = vunpack.c.l.b16 %v57
    %v96 = vunpack.c.l.b16 %v58
    %v97 = vunpack.c.l.b16 %v59
    %v98 = vunpack.c.l.b16 %v60
    %v99 = vunpack.c.l.b16 %v61
    %v100 = vunpack.c.l.b16 %v62
    %v101 = vunpack.c.l.b16 %v63
    %v102 = vunpack.c.l.b16 %v64
    %v103 = vunpack.c.l.b16 %v65
    %v104 = vunpack.c.l.b16 %v66
    %v105 = vunpack.c.l.b16 %v67
    %v106 = vunpack.c.l.b16 %v68
    %v107 = vunpack.c.l.b16 %v69
    %v108 = vpack.c.b16 %v93, %v92
    %v109 = vpack.c.b16 %v95, %v94
    %v110 = vpack.c.b16 %v97, %v96
    %v111 = vpack.c.b16 %v99, %v98
    %v112 = vpack.c.b16 %v101, %v100
    %v113 = vpack.c.b16 %v103, %v102
    %v114 = vpack.c.b16 %v105, %v104
    %v115 = vpack.c.b16 %v107, %v106
    %124 = vmatprep.subr.bf16.mxu0 0
    %125 = vmatpush1.bf16.xpose.msra.mxu0 %v108
    %126 = vmatprep.subr.bf16.mxu0 0
    %127 = vmatpush1.bf16.xpose.msra.mxu0 %v109
    %128 = vmatprep.subr.bf16.mxu0 0
    %129 = vmatpush1.bf16.xpose.msra.mxu0 %v110
    %130 = vmatprep.subr.bf16.mxu0 0
    %131 = vmatpush1.bf16.xpose.msra.mxu0 %v111
    %132 = vmatprep.subr.bf16.mxu0 0
    %133 = vmatpush1.bf16.xpose.msra.mxu0 %v112
    %134 = vmatprep.subr.bf16.mxu0 0
    %135 = vmatpush1.bf16.xpose.msra.mxu0 %v113
    %136 = vmatprep.subr.bf16.mxu0 0
    %137 = vmatpush1.bf16.xpose.msra.mxu0 %v114
    %138 = vmatprep.subr.bf16.mxu0 0
    %139 = vmatpush1.bf16.xpose.msra.mxu0 %v115
    %140 = vmatprep.subr.bf16.mxu0 0
    %141 = vmatpush1.bf16.xpose.msra.mxu0 0
    %142 = vmatprep.subr.bf16.mxu0 0
    %143 = vmatpush1.bf16.xpose.msra.mxu0 0
    %144 = vmatprep.subr.bf16.mxu0 0
    %145 = vmatpush1.bf16.xpose.msra.mxu0 0
    %146 = vmatprep.subr.bf16.mxu0 0
    %147 = vmatpush1.bf16.xpose.msra.mxu0 0
    %148 = vmatprep.subr.bf16.mxu0 0
    %149 = vmatpush1.bf16.xpose.msra.mxu0 0
    %150 = vmatprep.subr.bf16.mxu0 0
    %151 = vmatpush1.bf16.xpose.msra.mxu0 0
    %152 = vmatprep.subr.bf16.mxu0 0
    %153 = vmatpush1.bf16.xpose.msra.mxu0 0
    %154 = vmatprep.subr.bf16.mxu0 0
    %155 = vmatpush1.bf16.xpose.msra.mxu0 0
    %156 = vmatprep.mubr.bf16.mxu0 0
    %157 = vmatmul.mubr.bf16.gmra.mrb[0].mxu0 %v74
    %v158 = vpop.f32.mrb[0].mxu0
    %v159 = vadd.f32 0.0, %v158
    %v160 = vpop.f32.mrb[0].mxu0
    %v161 = vpop.f32.mrb[0].mxu0
    %v162 = vadd.f32 0.0, %v161
    %v163 = vpop.f32.mrb[0].mxu0
    %164 = vdwg.mxu0
    %v165 = vadd.f32 %v50, %v159
    %v166 = vadd.f32 %v51, %v162
    %167 = vst [vmem:[#allocation2] sm:$0xff] %v165
    %168 = vst [vmem:[#allocation2 + $0x8] sm:$0xff] %v166
    // Predicated region
    $region26: #{tpu_custom_call.1} parent=1 // pred_check
      %p169 = pneg %p44
    $region27: #{tpu_custom_call.1} parent=1 // pred_check_branch
      %171 = sbr.rel (%p169) target = $region29
    $region28: #{tpu_custom_call.1} parent=1 // pred_region
      %v172 = vld [vmem:[#allocation2] sm:$0xff]
      %v173 = vld [vmem:[#allocation2 + $0x8] sm:$0xff]
      %v174 = vld [vmem:[%s2] sm:$0x1]
      %v176 = vlaneseq
      %v177 = vshrl.u32 %v176, 7
      %v178 = vsub.s32 0, %v177
      %v179 = vrot.slane %v174, %v178
      %v181 = vadd.f32 %v172, %v179
      %v182 = vadd.f32 %v173, %v179
      %183 = vst [vmem:[#allocation8] sm:$0xff] %v181
      %184 = vst [vmem:[#allocation8 + $0x8] sm:$0xff] %v182
    $region29: #{tpu_custom_call.1} parent=1 // pred_fallthru
      _
    // Predicated region
    $region30: #{tpu_custom_call.1} parent=1 // pred_check
      _
    $region31: #{tpu_custom_call.1} parent=1 // pred_check_branch
      %186 = sbr.rel (0) target = $region33
    $region32: #{tpu_custom_call.1} parent=1 // pred_region
      %s188 = ssub.s32 256, 256
      %189 = vsyncadd [#allocation5], %s188
      %s190 = sshll.u32 [#allocation8], 4
      %s191 = int_to_ptr.vmem [resolvable:$true] %s190
      %196 = dma.vmem_to_hbm [thread:$0]  %s191, 256, %s3, [#allocation5], 128, 128, 8
    $region33: #{tpu_custom_call.1} parent=1 // pred_fallthru
      _
    // Predicated region
    $region34: #{tpu_custom_call.1} parent=1 // pred_check
      _
    $region35: #{tpu_custom_call.1} parent=1 // pred_check_branch
      %198 = sbr.rel (0) target = $region37
    $region36: #{tpu_custom_call.1} parent=1 // pred_region
      %199 = dma.done [#allocation5], 256
    $region37: #{tpu_custom_call.1} parent=1 // pred_fallthru
      _
    %200 = vsyncpa [#allocation4], 1
    %201 = vsyncpa [#allocation7], 1
    %202 = vsyncpa [#allocation5], 1

</llo_original>
